<compile_context>
chip_gen: v5e
topology: v5e:2x2
jax: 0.10.0
libtpu: 0.0.40
codegen_flags: <defaults>
</compile_context>

<pallas_src>
import jax
import jax.numpy as jnp
from jax.experimental import pallas as pl
from jax.experimental.pallas import tpu as pltpu

_MIB = 1024 * 1024


# ------------------------------ chip query ----------------------------------


def _tpu_vmem_and_cores():
    """Best-effort per-TensorCore VMEM capacity + TensorCores-per-chip.

    Falls back to conservative v7x-like defaults (64 MiB, 1 core) so the
    kernel still compiles and runs if the query is unavailable."""
    vmem_cap = 64 * _MIB
    num_cores = 1
    try:
        info = pltpu.get_tpu_info()
    except Exception:
        info = None
    if info is not None:
        for attr in ("vmem_capacity_bytes", "vmem_bytes", "vmem_size_bytes"):
            v = getattr(info, attr, None)
            if v:
                vmem_cap = int(v)
                break
        for attr in ("num_cores", "tensorcores_per_chip", "num_tensorcores",
                     "cores_per_chip"):
            c = getattr(info, attr, None)
            if c:
                num_cores = int(c)
                break
    return vmem_cap, num_cores


# ------------------------------ kernels -------------------------------------


def _fc2_small_kernel(x_ref, w_ref, o_ref):
    o_ref[...] = jnp.dot(
        x_ref[...], w_ref[...], preferred_element_type=jnp.float32
    ).astype(o_ref.dtype)


def _fc2_small_kernel_bias(x_ref, w_ref, b_ref, o_ref):
    out = jnp.dot(x_ref[...], w_ref[...], preferred_element_type=jnp.float32)
    o_ref[...] = (out + b_ref[...]).astype(o_ref.dtype)  # (1,N) broadcasts


# f32 output: accumulate straight into the resident output block (no scratch).
def _fc2_tiled_f32(x_ref, w_ref, o_ref):
    k = pl.program_id(2)

    @pl.when(k == 0)
    def _():
        o_ref[...] = jnp.zeros_like(o_ref)

    o_ref[...] += jnp.dot(
        x_ref[...], w_ref[...], preferred_element_type=jnp.float32
    )


def _fc2_tiled_f32_bias(x_ref, w_ref, b_ref, o_ref):
    k = pl.program_id(2)

    @pl.when(k == 0)
    def _():
        o_ref[...] = jnp.zeros_like(o_ref)

    o_ref[...] += jnp.dot(
        x_ref[...], w_ref[...], preferred_element_type=jnp.float32
    )

    @pl.when(k == pl.num_programs(2) - 1)
    def _():
        o_ref[...] = o_ref[...] + b_ref[...]


# Non-f32 output: keep an f32 scratch accumulator, cast on the last k step.
def _fc2_tiled_acc(x_ref, w_ref, o_ref, acc_ref):
    k = pl.program_id(2)

    @pl.when(k == 0)
    def _():
        acc_ref[...] = jnp.zeros_like(acc_ref)

    acc_ref[...] += jnp.dot(
        x_ref[...], w_ref[...], preferred_element_type=jnp.float32
    )

    @pl.when(k == pl.num_programs(2) - 1)
    def _():
        o_ref[...] = acc_ref[...].astype(o_ref.dtype)


def _fc2_tiled_acc_bias(x_ref, w_ref, b_ref, o_ref, acc_ref):
    k = pl.program_id(2)

    @pl.when(k == 0)
    def _():
        acc_ref[...] = jnp.zeros_like(acc_ref)

    acc_ref[...] += jnp.dot(
        x_ref[...], w_ref[...], preferred_element_type=jnp.float32
    )

    @pl.when(k == pl.num_programs(2) - 1)
    def _():
        o_ref[...] = (acc_ref[...] + b_ref[...]).astype(o_ref.dtype)


# ------------------------------ helpers -------------------------------------


def _pick_tile(dim, target, align):
    """Largest multiple of `align` that divides `dim` and is <= target.

    Returns `dim` itself when dim <= target or when no aligned divisor exists
    (full-extent blocks are always legal)."""
    if dim <= target:
        return dim
    t = (target // align) * align
    while t >= align:
        if dim % t == 0:
            return t
        t -= align
    return dim


def _sublane_align(dtype):
    itemsize = jnp.dtype(dtype).itemsize
    return {1: 32, 2: 16, 4: 8}.get(itemsize, 8)


def _make_spec(block_shape, index_map, buffer_count=2):
    """BlockSpec, optionally with a deeper pipeline; falls back gracefully."""
    if buffer_count > 2 and hasattr(pl, "Buffered"):
        try:
            return pl.BlockSpec(block_shape, index_map,
                                pipeline_mode=pl.Buffered(buffer_count))
        except TypeError:
            pass
    return pl.BlockSpec(block_shape, index_map)


# ------------------------------ wrapper -------------------------------------


def fully_connect2(
    x,
    weights,
    bias=None,
    *,
    tm_target=None,
    tn_target=None,
    tk_target=None,
    small_bytes_limit=None,
):
    """Pallas TPU implementation of Fully_Connect2.forward.

    x: [M, K], weights: [K, N], bias: optional [N]. Returns [M, N] in x.dtype.
    """
    M, K = x.shape
    K2, N = weights.shape
    assert K == K2, "in_features mismatch"
    use_bias = bias is not None

    out_dtype = x.dtype
    x_itemsize = jnp.dtype(x.dtype).itemsize
    w_itemsize = jnp.dtype(weights.dtype).itemsize
    out_itemsize = jnp.dtype(out_dtype).itemsize
    out_is_f32 = jnp.dtype(out_dtype) == jnp.dtype(jnp.float32)

    vmem_cap, num_cores = _tpu_vmem_and_cores()
    big_vmem = vmem_cap >= 100 * _MIB       # v5e/v6e: 128 MiB; v7x: 64 MiB per TC
    # Scoped-VMEM budget with headroom for Mosaic internal scratch / semaphores.
    vmem_budget = max(32 * _MIB, min(vmem_cap - 16 * _MIB, 100 * _MIB))

    if tm_target is None:
        tm_target = 512 if big_vmem else 256
    if tn_target is None:
        tn_target = 512
    if tk_target is None:
        tk_target = 2048 if big_vmem else 1024
    if small_bytes_limit is None:
        small_bytes_limit = (12 if big_vmem else 5) * _MIB

    b2d = bias.reshape(1, N) if use_bias else None
    b_itemsize = jnp.dtype(b2d.dtype).itemsize if use_bias else 0

    flops = 2 * M * N * K

    # ---------------- fast path: whole problem in VMEM ----------------------
    total_bytes = M * K * x_itemsize + K * N * w_itemsize + M * N * out_itemsize
    if total_bytes <= small_bytes_limit:
        if use_bias:
            in_specs = [
                pl.BlockSpec((M, K), lambda i: (0, 0)),
                pl.BlockSpec((K, N), lambda i: (0, 0)),
                pl.BlockSpec((1, N), lambda i: (0, 0)),
            ]
            kernel = _fc2_small_kernel_bias
            args = (x, weights, b2d)
        else:
            in_specs = [
                pl.BlockSpec((M, K), lambda i: (0, 0)),
                pl.BlockSpec((K, N), lambda i: (0, 0)),
            ]
            kernel = _fc2_small_kernel
            args = (x, weights)

        # Full-array blocks are still pipeline-buffered; cover that explicitly
        # (v5e's default scoped VMEM is only 16 MiB).
        fast_limit = int(max(32 * _MIB, min(2 * total_bytes + 4 * _MIB,
                                            vmem_budget)))
        cost = pl.CostEstimate(flops=flops, transcendentals=0,
                               bytes_accessed=total_bytes)

        return pl.pallas_call(
            kernel,
            out_shape=jax.ShapeDtypeStruct((M, N), out_dtype),
            grid_spec=pltpu.PrefetchScalarGridSpec(
                num_scalar_prefetch=0,
                grid=(1,),
                in_specs=in_specs,
                out_specs=pl.BlockSpec((M, N), lambda i: (0, 0)),
            ),
            compiler_params=pltpu.CompilerParams(
                vmem_limit_bytes=fast_limit,
            ),
            cost_estimate=cost,
        )(*args)

    # ---------------- tiled path ---------------------------------------------
    sub_align = _sublane_align(x.dtype)
    tm = _pick_tile(M, tm_target, sub_align)
    tn = _pick_tile(N, tn_target, 128)
    tk = _pick_tile(K, tk_target, 128)

    # Multi-TensorCore (v7x) split: only when >1 core detected, only if it
    # yields an even per-core-balanced block count, and keep tn a multiple of
    # 256 so the 256x256 MXU stays fed.
    if num_cores >= 2:
        nblocks = (M // tm) * (N // tn)
        if nblocks < num_cores or nblocks % num_cores != 0:
            cand = _pick_tile(N, max(256, tn // 2), 256)
            nb = (M // tm) * (N // cand)
            if cand < tn and nb >= num_cores and nb % num_cores == 0:
                tn = cand

    def footprint(tm_, tn_, tk_, w_bufs):
        b = 2 * tm_ * tk_ * x_itemsize          # x tiles (double-buffered)
        b += w_bufs * tk_ * tn_ * w_itemsize    # w tiles
        b += 2 * tm_ * tn_ * out_itemsize       # output tiles
        if not out_is_f32:
            b += tm_ * tn_ * 4                  # f32 accumulator scratch
        if use_bias:
            b += 2 * tn_ * b_itemsize
        return b

    # Deeper W pipeline in the weight-streaming-bound regime (tiny M).
    deep_w = (M <= tm) and (K // tk >= 3)
    w_bufs = 3 if deep_w else 2

    # Shrink tiles until the footprint fits the scoped-VMEM budget (guards the
    # full-extent fallback of _pick_tile on awkwardly factored dims).
    while footprint(tm, tn, tk, w_bufs) > vmem_budget:
        if tk > 128:
            new = _pick_tile(K, max(128, tk // 2), 128)
            if new < tk:
                tk = new
                continue
        if tn > 128:
            new = _pick_tile(N, max(128, tn // 2), 128)
            if new < tn:
                tn = new
                continue
        if tm > sub_align:
            new = _pick_tile(M, max(sub_align, tm // 2), sub_align)
            if new < tm:
                tm = new
                continue
        break

    deep_w = (M <= tm) and (K // tk >= 3)
    if deep_w and footprint(tm, tn, tk, 3) > vmem_budget:
        deep_w = False
    w_bufs = 3 if deep_w else 2

    assert M % tm == 0 and N % tn == 0 and K % tk == 0

    vmem_limit = int(min(max(footprint(tm, tn, tk, w_bufs) + 8 * _MIB,
                             32 * _MIB),
                         vmem_budget))

    grid = (M // tm, N // tn, K // tk)
    bytes_accessed = (M * K * x_itemsize * (N // tn)
                      + K * N * w_itemsize * (M // tm)
                      + M * N * out_itemsize)
    cost = pl.CostEstimate(flops=flops, transcendentals=0,
                           bytes_accessed=bytes_accessed)

    if out_is_f32:
        kernel = _fc2_tiled_f32_bias if use_bias else _fc2_tiled_f32
        scratch = []
    else:
        kernel = _fc2_tiled_acc_bias if use_bias else _fc2_tiled_acc
        scratch = [pltpu.VMEM((tm, tn), jnp.float32)]

    def _launch(use_deep_w):
        w_spec = _make_spec((tk, tn), lambda i, j, k: (k, j),
                            buffer_count=3 if use_deep_w else 2)
        in_specs = [pl.BlockSpec((tm, tk), lambda i, j, k: (i, k)), w_spec]
        args = [x, weights]
        if use_bias:
            in_specs.append(pl.BlockSpec((1, tn), lambda i, j, k: (0, j)))
            args.append(b2d)

        return pl.pallas_call(
            kernel,
            out_shape=jax.ShapeDtypeStruct((M, N), out_dtype),
            grid_spec=pltpu.PrefetchScalarGridSpec(
                num_scalar_prefetch=0,
                grid=grid,
                in_specs=in_specs,
                out_specs=pl.BlockSpec((tm, tn), lambda i, j, k: (i, j)),
                scratch_shapes=scratch,
            ),
            compiler_params=pltpu.CompilerParams(
                dimension_semantics=("parallel", "parallel", "arbitrary"),
                vmem_limit_bytes=vmem_limit,
            ),
            cost_estimate=cost,
        )(*args)

    if deep_w:
        try:
            return _launch(True)
        except Exception:
            # Safe fallback if this build rejects pipeline_mode=Buffered(3).
            return _launch(False)
    return _launch(False)


def init_params(key, in_features, out_features, use_bias=False):
    """Matches reset_parameters(): kaiming_normal_(mode='fan_out',
    nonlinearity='relu') on a (in, out) tensor => fan_out = in_features,
    std = sqrt(2 / in_features); bias zero-filled."""
    std = (2.0 / in_features) ** 0.5
    w = jax.random.normal(key, (in_features, out_features), dtype=jnp.float32) * std
    b = jnp.zeros((out_features,), dtype=jnp.float32) if use_bias else None
    return w, b


if __name__ == "__main__":
    key = jax.random.PRNGKey(0)
    kx, kw, kb, kx2, kw2, kb2, kx3, kw3 = jax.random.split(key, 8)

    # --- 1) Fast path, module default (bias=False), MNIST-ish FC ------------
    batch, in_features, out_features = 8, 256, 128
    x = jax.random.normal(kx, (batch, in_features), dtype=jnp.float32)
    weights, bias = init_params(kw, in_features, out_features, use_bias=False)

    out = jax.block_until_ready(fully_connect2(x, weights, bias))
    ref = x @ weights
    assert out.shape == (batch, out_features)
    assert jnp.allclose(out, ref, atol=1e-4, rtol=1e-4), "fast path (no bias) mismatch"

    # --- 2) Fast path with bias ----------------------------------------------
    b_nonzero = jax.random.normal(kb, (out_features,), dtype=jnp.float32)
    out_b = jax.block_until_ready(fully_connect2(x, weights, b_nonzero))
    ref_b = x @ weights + b_nonzero
    assert jnp.allclose(out_b, ref_b, atol=1e-4, rtol=1e-4), "fast path (bias) mismatch"

    # --- 3) Tiled path (forced), f32 accumulate-into-output + bias + K steps -
    M2, K2, N2 = 16, 2048, 256
    x2 = jax.random.normal(kx2, (M2, K2), dtype=jnp.float32)
    w2, _ = init_params(kw2, K2, N2, use_bias=False)
    b2 = jax.random.normal(kb2, (N2,), dtype=jnp.float32)
    out2 = jax.block_until_ready(
        fully_connect2(x2, w2, b2, small_bytes_limit=0, tk_target=512)
    )
    ref2 = x2 @ w2 + b2
    assert jnp.allclose(out2, ref2, atol=1e-3, rtol=1e-4), "tiled f32 path mismatch"

    # --- 4) Tiled path (forced), bf16 output -> scratch-accumulator path ------
    M3, K3, N3 = 16, 1024, 256
    x3 = jax.random.normal(kx3, (M3, K3), dtype=jnp.float32).astype(jnp.bfloat16)
    w3, _ = init_params(kw3, K3, N3, use_bias=False)
    w3 = w3.astype(jnp.bfloat16)
    out3 = jax.block_until_ready(
        fully_connect2(x3, w3, None, small_bytes_limit=0, tk_target=256)
    )
    ref3 = x3.astype(jnp.float32) @ w3.astype(jnp.float32)
    assert jnp.allclose(out3.astype(jnp.float32), ref3, atol=0.1, rtol=0.05), \
        "tiled bf16 path mismatch"

    print("KERNEL_OK")
</pallas_src>

<mosaic_0001>
module attributes {stable_mosaic.version = 11 : i64} {
  func.func @_fc2_small_kernel(%arg0: i32, %arg1: memref<8x256xf32, #tpu.memory_space<vmem>>, %arg2: memref<256x128xf32, #tpu.memory_space<vmem>>, %arg3: memref<8x128xf32, #tpu.memory_space<vmem>>) attributes {dimension_semantics = [#tpu.dimension_semantics<arbitrary>], iteration_bounds = array<i64: 1>, scalar_prefetch = 0 : i64, scratch_operands = 0 : i64, tpu.core_type = #tpu.core_type<tc>, window_params = [{pipeline_mode = #tpu.pipeline_mode<synchronous>, transform_indices = @transform_0, window_bounds = array<i64: 8, 256>}, {pipeline_mode = #tpu.pipeline_mode<synchronous>, transform_indices = @transform_1, window_bounds = array<i64: 256, 128>}, {pipeline_mode = #tpu.pipeline_mode<synchronous>, transform_indices = @transform_2, window_bounds = array<i64: 8, 128>}]} {
    %c0 = arith.constant 0 : index
    %c0_0 = arith.constant 0 : index
    %0 = vector.load %arg1[%c0, %c0_0] : memref<8x256xf32, #tpu.memory_space<vmem>>, vector<8x256xf32>
    %c0_1 = arith.constant 0 : index
    %c0_2 = arith.constant 0 : index
    %1 = vector.load %arg2[%c0_1, %c0_2] : memref<256x128xf32, #tpu.memory_space<vmem>>, vector<256x128xf32>
    %cst = arith.constant dense<0.000000e+00> : vector<8x128xf32>
    %2 = tpu.matmul %0, %1, %cst {dimension_numbers = #tpu.dot_dimension_numbers<[1], [0], [0], [1], [0, 0, 1, 1], [], []>} : vector<8x256xf32>, vector<256x128xf32>, vector<8x128xf32> -> vector<8x128xf32>
    %c0_3 = arith.constant 0 : index
    %c0_4 = arith.constant 0 : index
    %3 = vector.load %arg3[%c0_3, %c0_4] : memref<8x128xf32, #tpu.memory_space<vmem>>, vector<8x128xf32>
    tpu.vector_store %arg3[%c0_3, %c0_4], %2 {strides = array<i32>} : memref<8x128xf32, #tpu.memory_space<vmem>>, vector<8x128xf32>,
    return
  }
  func.func @transform_0(%arg0: i32) -> (i32, i32) {
    %c0_i32 = arith.constant 0 : i32
    %c0_i32_0 = arith.constant 0 : i32
    %c0_i32_1 = arith.constant 0 : i32
    return %c0_i32, %c0_i32_0 : i32, i32
  }
  func.func @transform_1(%arg0: i32) -> (i32, i32) {
    %c0_i32 = arith.constant 0 : i32
    %c0_i32_0 = arith.constant 0 : i32
    %c0_i32_1 = arith.constant 0 : i32
    return %c0_i32, %c0_i32_0 : i32, i32
  }
  func.func @transform_2(%arg0: i32) -> (i32, i32) {
    %c0_i32 = arith.constant 0 : i32
    %c0_i32_0 = arith.constant 0 : i32
    %c0_i32_1 = arith.constant 0 : i32
    return %c0_i32, %c0_i32_0 : i32, i32
  }
}

</mosaic_0001>

<llo_original>
// kernel: tpu_custom_call.1
$region0: #{tpu_custom_call.1}
  #allocation0 [shape = 'u32[]', space=smem, size = 0x4, offset = 0x4, fixed_abs, tag = 'smem constant byte address 0x4 - core index']
  #allocation1 [shape = 'u32[72,128]{1,0:T(1,128)}', space=vmem, size = 0x9000, scoped, tag = 'internal scratch']
  %s0 = inlined_call_operand.hbm [shape: f32[8,256], index: 0, kind: input, shape index: {}]
  %s1 = inlined_call_operand.hbm [shape: f32[256,128], index: 1, kind: input, shape index: {}]
  %s2 = inlined_call_operand.hbm [shape: f32[8,128], index: 2, kind: output, shape index: {}]
  %s3 = sld [smem:[#allocation0]]
  $region26: #{tpu_custom_call.1} parent=0
    _
  %s5 = ssub.s32 1, %s3
  %s6 = scalar_select 0, %s5, %s3
  $region1: #{tpu_custom_call.1} parent=0
    #allocation2 [shape = 'u8[8192]{0}', space=vmem, size = 0x2000, scoped, tag = 'input window, operand 0, single buffered']
    #allocation3 [shape = 's32[1]{0}', space=sflag, size = 0x4, scoped, tag = 'scoped memory for tpu_custom_call.1']
    #allocation4 [shape = 's32[1]{0}', space=sflag, size = 0x4, scoped, tag = 'scoped memory for tpu_custom_call.1']
    #allocation5 [shape = 'u8[131072]{0}', space=vmem, size = 0x20000, scoped, tag = 'input window, operand 1, single buffered']
    #allocation6 [shape = 's32[1]{0}', space=sflag, size = 0x4, scoped, tag = 'scoped memory for tpu_custom_call.1']
    #allocation7 [shape = 'u8[4096]{0}', space=vmem, size = 0x1000, scoped, tag = 'output window, operand 0, single buffered']
    %7 = vsyncpa [#allocation3], 0
    %8 = vsyncpa [#allocation6], 0
    %9 = vsyncpa [#allocation4], 0
    // Predicated region
    $region2: #{tpu_custom_call.1} parent=1 // pred_check
      _
    $region3: #{tpu_custom_call.1} parent=1 // pred_check_branch
      %11 = sbr.rel (0) target = $region5
    $region4: #{tpu_custom_call.1} parent=1 // pred_region
      %13 = vsyncadd [#allocation3], 0
      %s15 = sshll.u32 %s0, 4
      %s16 = int_to_ptr.hbm [resolvable:$true] %s15
      %s17 = sshll.u32 [#allocation2], 4
      %s18 = int_to_ptr.vmem [resolvable:$true] %s17
      %20 = dma.hbm_to_vmem [thread:$0]  %s16, 256, %s18, [#allocation3]
    $region5: #{tpu_custom_call.1} parent=1 // pred_fallthru
      _
    // Predicated region
    $region6: #{tpu_custom_call.1} parent=1 // pred_check
      _
    $region7: #{tpu_custom_call.1} parent=1 // pred_check_branch
      %22 = sbr.rel (0) target = $region9
    $region8: #{tpu_custom_call.1} parent=1 // pred_region
      %24 = vsyncadd [#allocation6], 0
      %s25 = sshll.u32 %s1, 4
      %s26 = int_to_ptr.hbm [resolvable:$true] %s25
      %s27 = sshll.u32 [#allocation5], 4
      %s28 = int_to_ptr.vmem [resolvable:$true] %s27
      %33 = dma.hbm_to_vmem [thread:$0]  %s26, 4096, %s28, [#allocation6], 128, 128, 8
    $region9: #{tpu_custom_call.1} parent=1 // pred_fallthru
      _
    // Predicated region
    $region10: #{tpu_custom_call.1} parent=1 // pred_check
      _
    $region11: #{tpu_custom_call.1} parent=1 // pred_check_branch
      %35 = sbr.rel (0) target = $region13
    $region12: #{tpu_custom_call.1} parent=1 // pred_region
      %37 = dma.done [#allocation3], 256
    $region13: #{tpu_custom_call.1} parent=1 // pred_fallthru
      _
    // Predicated region
    $region14: #{tpu_custom_call.1} parent=1 // pred_check
      _
    $region15: #{tpu_custom_call.1} parent=1 // pred_check_branch
      %39 = sbr.rel (0) target = $region17
    $region16: #{tpu_custom_call.1} parent=1 // pred_region
      %41 = dma.done [#allocation6], 4096
    $region17: #{tpu_custom_call.1} parent=1 // pred_fallthru
      _
    %v42 = vld [vmem:[#allocation2] sm:$0xff]
    %v43 = vld [vmem:[#allocation2 + $0x8] sm:$0xff]
    %v44 = vld [vmem:[#allocation5] sm:$0xff]
    %v45 = vld [vmem:[#allocation5 + $0x8] sm:$0xff]
    %v46 = vld [vmem:[#allocation5 + $0x10] sm:$0xff]
    %v47 = vld [vmem:[#allocation5 + $0x18] sm:$0xff]
    %v48 = vld [vmem:[#allocation5 + $0x20] sm:$0xff]
    %v49 = vld [vmem:[#allocation5 + $0x28] sm:$0xff]
    %v50 = vld [vmem:[#allocation5 + $0x30] sm:$0xff]
    %v51 = vld [vmem:[#allocation5 + $0x38] sm:$0xff]
    %v52 = vld [vmem:[#allocation5 + $0x40] sm:$0xff]
    %v53 = vld [vmem:[#allocation5 + $0x48] sm:$0xff]
    %v54 = vld [vmem:[#allocation5 + $0x50] sm:$0xff]
    %v55 = vld [vmem:[#allocation5 + $0x58] sm:$0xff]
    %v56 = vld [vmem:[#allocation5 + $0x60] sm:$0xff]
    %v57 = vld [vmem:[#allocation5 + $0x68] sm:$0xff]
    %v58 = vld [vmem:[#allocation5 + $0x70] sm:$0xff]
    %v59 = vld [vmem:[#allocation5 + $0x78] sm:$0xff]
    %v60 = vld [vmem:[#allocation5 + $0x80] sm:$0xff]
    %v61 = vld [vmem:[#allocation5 + $0x88] sm:$0xff]
    %v62 = vld [vmem:[#allocation5 + $0x90] sm:$0xff]
    %v63 = vld [vmem:[#allocation5 + $0x98] sm:$0xff]
    %v64 = vld [vmem:[#allocation5 + $0xa0] sm:$0xff]
    %v65 = vld [vmem:[#allocation5 + $0xa8] sm:$0xff]
    %v66 = vld [vmem:[#allocation5 + $0xb0] sm:$0xff]
    %v67 = vld [vmem:[#allocation5 + $0xb8] sm:$0xff]
    %v68 = vld [vmem:[#allocation5 + $0xc0] sm:$0xff]
    %v69 = vld [vmem:[#allocation5 + $0xc8] sm:$0xff]
    %v70 = vld [vmem:[#allocation5 + $0xd0] sm:$0xff]
    %v71 = vld [vmem:[#allocation5 + $0xd8] sm:$0xff]
    %v72 = vld [vmem:[#allocation5 + $0xe0] sm:$0xff]
    %v73 = vld [vmem:[#allocation5 + $0xe8] sm:$0xff]
    %v74 = vld [vmem:[#allocation5 + $0xf0] sm:$0xff]
    %v75 = vld [vmem:[#allocation5 + $0xf8] sm:$0xff]
    %76 = vmatpush.msra.mxu0 %v59
    %77 = vmatpush.msra.mxu0 %v58
    %78 = vmatpush.msra.mxu0 %v57
    %79 = vmatpush.msra.mxu0 %v56
    %80 = vmatpush.msra.mxu0 %v55
    %81 = vmatpush.msra.mxu0 %v54
    %82 = vmatpush.msra.mxu0 %v53
    %83 = vmatpush.msra.mxu0 %v52
    %84 = vmatpush.msra.mxu0 %v51
    %85 = vmatpush.msra.mxu0 %v50
    %86 = vmatpush.msra.mxu0 %v49
    %87 = vmatpush.msra.mxu0 %v48
    %88 = vmatpush.msra.mxu0 %v47
    %89 = vmatpush.msra.mxu0 %v46
    %90 = vmatpush.msra.mxu0 %v45
    %91 = vmatpush.msra.mxu0 %v44
    %92 = vmatmul.f32.gmra.mxu0 %v42
    %v93 = vpop.f32.mrf.mxu0
    %v94 = vadd.f32 0.0, %v93
    %95 = vdwg.mxu0
    %96 = vmatpush.msra.mxu0 %v75
    %97 = vmatpush.msra.mxu0 %v74
    %98 = vmatpush.msra.mxu0 %v73
    %99 = vmatpush.msra.mxu0 %v72
    %100 = vmatpush.msra.mxu0 %v71
    %101 = vmatpush.msra.mxu0 %v70
    %102 = vmatpush.msra.mxu0 %v69
    %103 = vmatpush.msra.mxu0 %v68
    %104 = vmatpush.msra.mxu0 %v67
    %105 = vmatpush.msra.mxu0 %v66
    %106 = vmatpush.msra.mxu0 %v65
    %107 = vmatpush.msra.mxu0 %v64
    %108 = vmatpush.msra.mxu0 %v63
    %109 = vmatpush.msra.mxu0 %v62
    %110 = vmatpush.msra.mxu0 %v61
    %111 = vmatpush.msra.mxu0 %v60
    %112 = vmatmul.f32.gmra.mxu0 %v43
    %v113 = vpop.f32.mrf.mxu0
    %v114 = vadd.f32 %v94, %v113
    %115 = vdwg.mxu0
    %116 = vst [vmem:[#allocation7] sm:$0xff] %v114
    // Predicated region
    $region18: #{tpu_custom_call.1} parent=1 // pred_check
      _
    $region19: #{tpu_custom_call.1} parent=1 // pred_check_branch
      %118 = sbr.rel (0) target = $region21
    $region20: #{tpu_custom_call.1} parent=1 // pred_region
      %120 = vsyncadd [#allocation4], 0
      %s122 = sshll.u32 [#allocation7], 4
      %s123 = int_to_ptr.vmem [resolvable:$true] %s122
      %s124 = sshll.u32 %s2, 4
      %s125 = int_to_ptr.hbm [resolvable:$true] %s124
      %127 = dma.vmem_to_hbm [thread:$0]  %s123, 128, %s125, [#allocation4]
    $region21: #{tpu_custom_call.1} parent=1 // pred_fallthru
      _
    // Predicated region
    $region22: #{tpu_custom_call.1} parent=1 // pred_check
      _
    $region23: #{tpu_custom_call.1} parent=1 // pred_check_branch
      %129 = sbr.rel (0) target = $region25
    $region24: #{tpu_custom_call.1} parent=1 // pred_region
      %131 = dma.done [#allocation4], 128
    $region25: #{tpu_custom_call.1} parent=1 // pred_fallthru
      _
    %132 = vsyncpa [#allocation3], 1
    %133 = vsyncpa [#allocation6], 1
    %134 = vsyncpa [#allocation4], 1

</llo_original>
